<compile_context>
chip_gen: v7x
topology: tpu7x:2x2x1
jax: 0.10.0
libtpu: 0.0.40
codegen_flags: <defaults>
</compile_context>

<pallas_src>
import jax
import jax.numpy as jnp
from jax import lax
from jax.experimental import pallas as pl
from jax.experimental.pallas import tpu as pltpu

_BIG = 1e9  # plain Python float — a jnp scalar here would be a captured const
_NUM_STATS = 11  # ce_sum, gt_sum, tx_sum, tx {rmin,-rmax,cmin,-cmax}, gt {rmin,-rmax,cmin,-cmax}


def _make_wnet_stats_kernel(C, tile_h, tiles_per_group, H):
    """Kernel factory; closes over static Python ints only."""

    def kernel(x_ref, gt_ref, out_ref):
        g = pl.program_id(1)
        t = pl.program_id(2)
        W = x_ref.shape[3]

        # Global row of this tile's first row; may run past H for the padded
        # tail tile or for clamped duplicate tiles of the last group.
        row_start = (g * tiles_per_group + t) * tile_h
        row_ids = lax.broadcasted_iota(jnp.int32, (tile_h, 1), 0) + row_start
        valid = row_ids < H                                    # (tile_h, 1) bool

        # gt stays narrow in HBM; widen in-register and mask the padded rows.
        gt_t = jnp.where(valid, gt_ref[0].astype(jnp.int32), 0)   # (tile_h, W)
        gt1 = gt_t == 1
        gt_f = gt_t.astype(jnp.float32)

        # ---- fused per-pixel pass: CE + predicted mask ----
        if C == 2:
            # NOTE: 2-class fast path folds labels outside {0,1} into class 0;
            # valid for binary segmentation labels (documented assumption).
            x0 = jnp.where(valid, x_ref[0, 0].astype(jnp.float32), 0.0)
            x1 = jnp.where(valid, x_ref[0, 1].astype(jnp.float32), 0.0)
            m = x1 - x0
            tx = m > 0.0                    # trans_x = (x1 > x0)
            z = jnp.where(gt1, -m, m)       # CE == softplus of the signed margin
            ce_pix = jnp.maximum(z, 0.0) + jnp.log(1.0 + jnp.exp(-jnp.abs(z)))
        else:
            chans = [jnp.where(valid, x_ref[0, c].astype(jnp.float32), 0.0)
                     for c in range(C)]
            tx = chans[1] > chans[0]
            xmax = chans[0]
            for c in range(1, C):
                xmax = jnp.maximum(xmax, chans[c])
            esum = jnp.exp(chans[0] - xmax)
            for c in range(1, C):
                esum = esum + jnp.exp(chans[c] - xmax)
            lse = jnp.log(esum) + xmax
            sel = chans[0]
            for c in range(1, C):
                sel = jnp.where(gt_t == c, chans[c], sel)
            ce_pix = lse - sel

        ce_pix = jnp.where(valid, ce_pix, 0.0)   # kill padded-tail rows
        tx_f = tx.astype(jnp.float32)            # already 0 on masked rows (x0=x1=0)

        ce_sum = jnp.sum(ce_pix)
        gt_sum = jnp.sum(gt_f)
        tx_sum = jnp.sum(tx_f)

        # ---- bounding boxes from row/col "any" reductions (tiny arrays) ----
        gt1_f = gt1.astype(jnp.float32)
        row_any_tx = jnp.max(tx_f, axis=1, keepdims=True)      # (tile_h, 1)
        col_any_tx = jnp.max(tx_f, axis=0, keepdims=True)      # (1, W)
        row_any_gt = jnp.max(gt1_f, axis=1, keepdims=True)
        col_any_gt = jnp.max(gt1_f, axis=0, keepdims=True)

        row_idx = row_ids.astype(jnp.float32)                  # global rows
        col_idx = lax.broadcasted_iota(jnp.int32, (1, W), 1).astype(jnp.float32)

        def _min_masked(any_v, idx):
            return jnp.min(jnp.where(any_v > 0.0, idx, _BIG))

        def _negmax_masked(any_v, idx):
            # -(max over masked idx), accumulated as a min.
            return jnp.min(jnp.where(any_v > 0.0, -idx, _BIG))

        stats = [
            ce_sum,                               # 0  (sum)
            gt_sum,                               # 1  (sum)
            tx_sum,                               # 2  (sum)
            _min_masked(row_any_tx, row_idx),     # 3  tx rmin   (min)
            _negmax_masked(row_any_tx, row_idx),  # 4  -tx rmax  (min)
            _min_masked(col_any_tx, col_idx),     # 5  tx cmin   (min)
            _negmax_masked(col_any_tx, col_idx),  # 6  -tx cmax  (min)
            _min_masked(row_any_gt, row_idx),     # 7  gt rmin   (min)
            _negmax_masked(row_any_gt, row_idx),  # 8  -gt rmax  (min)
            _min_masked(col_any_gt, col_idx),     # 9  gt cmin   (min)
            _negmax_masked(col_any_gt, col_idx),  # 10 -gt cmax  (min)
        ]

        # ---- accumulate into the (batch, group) output block (resident over t) ----
        lane = lax.broadcasted_iota(jnp.int32, (1, 1, 8, 128), 3)
        is_sum = lane < 3
        neutral = jnp.where(is_sum, 0.0, _BIG).astype(jnp.float32)

        @pl.when(t == 0)
        def _():
            out_ref[...] = neutral

        upd = neutral
        for k, s in enumerate(stats):
            upd = jnp.where(lane == k, s, upd)

        acc = out_ref[...]
        out_ref[...] = jnp.where(is_sum, acc + upd, jnp.minimum(acc, upd))

    return kernel


def _round_up(v, m):
    return -(-v // m) * m


def _sublane_align(dtype):
    # f32/int32 -> 8, bf16 -> 16, int8/uint8 -> 32 (native second-minor tiling).
    return max(8, 32 // jnp.dtype(dtype).itemsize)


def _vmem_capacity_bytes():
    try:
        return int(pltpu.get_tpu_info().vmem_capacity_bytes)
    except Exception:
        return 128 << 20  # conservative fallback (v5e/v6e figure)


def _pick_tile_h(H, padded_row_bytes, budget_bytes, row_align, min_tiles):
    """Largest aligned tile height within the byte budget, yielding at least
    `min_tiles` row tiles when the reduction axis is split across groups."""
    max_rows = max(row_align,
                   (budget_bytes // max(padded_row_bytes, 1)) // row_align * row_align)
    if min_tiles <= 1:
        return H if H <= max_rows else max_rows
    target = max(row_align, _round_up(-(-H // min_tiles), row_align))
    th = min(max_rows, target)
    return H if th >= H else th


def wnet_loss(x, gt):
    """x: (B, C, H, W) f32/bf16 logits, gt: (B, H, W) int labels -> scalar loss."""
    B, C, H, W = x.shape
    assert C >= 2, "WNetLoss compares channel 1 vs channel 0"

    if gt.dtype not in (jnp.int32, jnp.int8, jnp.uint8):
        # A cast is needed anyway (e.g. int64/bool); emit the narrow int8
        # stream so the HBM-bound kernel moves fewer bytes (labels < 128).
        gt = gt.astype(jnp.int8)

    # ---- generation-aware tiling (v5e/v6e: 128 MiB VMEM, v7x: 64 MiB) ----
    cap = _vmem_capacity_bytes()
    budget = (16 << 20) if cap >= (96 << 20) else (8 << 20)
    W_pad = _round_up(W, 128)                       # lane padding is real VMEM
    padded_row_bytes = (C * x.dtype.itemsize + gt.dtype.itemsize) * W_pad
    row_align = max(_sublane_align(x.dtype), _sublane_align(gt.dtype))

    # Split the row-tile (reduction) axis into two "parallel" groups when the
    # batch axis alone cannot keep both v7x TensorCores busy (B odd / B == 1).
    n_groups = 2 if (B % 2 == 1) else 1

    tile_h = _pick_tile_h(H, padded_row_bytes, budget, row_align, n_groups)
    n_row_blocks = pl.cdiv(H, tile_h)
    tiles_per_group = pl.cdiv(n_row_blocks, n_groups)

    tile_bytes = tile_h * padded_row_bytes
    vmem_limit = int(min(cap * 3 // 4, max(32 << 20, 3 * tile_bytes + (4 << 20))))

    def x_index(b, g, t):
        blk = jnp.minimum(g * tiles_per_group + t, n_row_blocks - 1)
        return (b, 0, blk, 0)

    def gt_index(b, g, t):
        blk = jnp.minimum(g * tiles_per_group + t, n_row_blocks - 1)
        return (b, blk, 0)

    npix = B * H * W
    cost = pl.CostEstimate(
        flops=int((12 + 2 * C) * npix),
        transcendentals=int(2 * npix),
        bytes_accessed=int(npix * (C * x.dtype.itemsize + gt.dtype.itemsize)
                           + B * n_groups * 8 * 128 * 4),
    )

    # TODO(synk): for W % 128 != 0 a lane-dense (B, C, H*W) flatten (bbox
    # indices recovered as flat // W and flat % W) would avoid lane padding.
    kernel = _make_wnet_stats_kernel(C, tile_h, tiles_per_group, H)
    stats = pl.pallas_call(
        kernel,
        out_shape=jax.ShapeDtypeStruct((B, n_groups, 8, 128), jnp.float32),
        grid=(B, n_groups, tiles_per_group),
        in_specs=[
            pl.BlockSpec((1, C, tile_h, W), x_index),
            pl.BlockSpec((1, tile_h, W), gt_index),
        ],
        out_specs=pl.BlockSpec((1, 1, 8, 128), lambda b, g, t: (b, g, 0, 0)),
        compiler_params=pltpu.CompilerParams(
            dimension_semantics=("parallel", "parallel", "arbitrary"),
            vmem_limit_bytes=vmem_limit,
        ),
        cost_estimate=cost,
    )(x, gt)

    # ---------------- tiny epilogue in XLA (~40 flops) ----------------
    s = stats[:, :, 0, :]                        # (B, G, 128)
    sums = jnp.sum(s[:, :, 0:3], axis=1)         # sums add across groups
    mins = jnp.min(s[:, :, 3:3 + 8], axis=1)     # min lanes (incl. -max) combine by min

    ce_sum = jnp.sum(sums[:, 0])
    gt_sum_b = sums[:, 1]
    tx_sum_b = sums[:, 2]
    tx_rmin, tx_rmax = mins[:, 0], -mins[:, 1]
    tx_cmin, tx_cmax = mins[:, 2], -mins[:, 3]
    gt_rmin, gt_rmax = mins[:, 4], -mins[:, 5]
    gt_cmin, gt_cmax = mins[:, 6], -mins[:, 7]

    n = jnp.float32(B * H * W)
    cel_loss = ce_sum / n
    area_loss = jnp.square(jnp.sum(tx_sum_b) / n - jnp.sum(gt_sum_b) / n)

    is_calc = jnp.logical_and(jnp.min(gt_sum_b) > 0.0, jnp.min(tx_sum_b) > 0.0)

    # Zero the bbox extents when any mask is empty so the ±1e9 sentinels never
    # enter the squared arithmetic.
    def _safe(v):
        return jnp.where(is_calc, v, 0.0)

    tx_rmin, tx_rmax, tx_cmin, tx_cmax = map(_safe, (tx_rmin, tx_rmax, tx_cmin, tx_cmax))
    gt_rmin, gt_rmax, gt_cmin, gt_cmax = map(_safe, (gt_rmin, gt_rmax, gt_cmin, gt_cmax))

    wf = jnp.float32(W)
    hf = jnp.float32(H)
    # NOTE: mirrors the PyTorch reference exactly — row coordinates are divided
    # by w and column coordinates by h (intentionally "swapped"); keep parity.
    x_cx = (tx_rmin + tx_rmax) / 2.0 / wf
    x_cy = (tx_cmin + tx_cmax) / 2.0 / hf
    x_len = jnp.square((tx_rmax - tx_rmin) / wf) + jnp.square((tx_cmax - tx_cmin) / hf)
    g_cx = (gt_rmin + gt_rmax) / 2.0 / wf
    g_cy = (gt_cmin + gt_cmax) / 2.0 / hf
    g_len = jnp.square((gt_rmax - gt_rmin) / wf) + jnp.square((gt_cmax - gt_cmin) / hf)

    dist_c = jnp.sum(jnp.square(x_cx - g_cx) + jnp.square(x_cy - g_cy)) / jnp.float32(B)
    dist_length = jnp.sum(jnp.square(x_len - g_len)) / jnp.float32(B)
    dist_c = jnp.where(is_calc, dist_c, 0.0)
    dist_length = jnp.where(is_calc, dist_length, 0.0)

    return cel_loss + area_loss + 0.5 * dist_c + 0.5 * dist_length


# ---------------- pure-JAX reference (mirrors the PyTorch forward) ----------------
def wnet_loss_ref(x, gt):
    x = x.astype(jnp.float32)
    gt = gt.astype(jnp.int32)
    B, C, H, W = x.shape

    xm = jnp.max(x, axis=1, keepdims=True)
    lse = jnp.log(jnp.sum(jnp.exp(x - xm), axis=1)) + xm[:, 0]
    sel = jnp.take_along_axis(x, gt[:, None, :, :], axis=1)[:, 0]
    cel = jnp.mean(lse - sel)

    gt_f = gt.astype(jnp.float32)
    tx_bool = x[:, 1] > x[:, 0]
    trans_x = tx_bool.astype(jnp.float32)
    area = float(B * H * W)
    area_loss = jnp.square(jnp.sum(trans_x) / area - jnp.sum(gt_f) / area)

    is_calc = jnp.logical_and(
        jnp.all(jnp.sum(gt_f, axis=(1, 2)) > 0),
        jnp.all(jnp.sum(trans_x, axis=(1, 2)) > 0))

    row_idx = jnp.arange(H, dtype=jnp.float32)[None, :, None] * jnp.ones((B, H, W), jnp.float32)
    col_idx = jnp.arange(W, dtype=jnp.float32)[None, None, :] * jnp.ones((B, H, W), jnp.float32)
    big = 1e9

    def bbox(m):
        rmin = jnp.min(jnp.where(m, row_idx, big), axis=(1, 2))
        rmax = jnp.max(jnp.where(m, row_idx, -big), axis=(1, 2))
        cmin = jnp.min(jnp.where(m, col_idx, big), axis=(1, 2))
        cmax = jnp.max(jnp.where(m, col_idx, -big), axis=(1, 2))
        return rmin, rmax, cmin, cmax

    x_rmin, x_rmax, x_cmin, x_cmax = bbox(tx_bool)
    g_rmin, g_rmax, g_cmin, g_cmax = bbox(gt == 1)

    x_cx = (x_rmin + x_rmax) / 2.0 / W
    x_cy = (x_cmin + x_cmax) / 2.0 / H
    x_len = jnp.square((x_rmax - x_rmin) / W) + jnp.square((x_cmax - x_cmin) / H)
    g_cx = (g_rmin + g_rmax) / 2.0 / W
    g_cy = (g_cmin + g_cmax) / 2.0 / H
    g_len = jnp.square((g_rmax - g_rmin) / W) + jnp.square((g_cmax - g_cmin) / H)

    dist_c = jnp.sum(jnp.square(x_cx - g_cx) + jnp.square(x_cy - g_cy)) / B
    dist_length = jnp.sum(jnp.square(x_len - g_len)) / B
    dist_c = jnp.where(is_calc, dist_c, 0.0)
    dist_length = jnp.where(is_calc, dist_length, 0.0)

    return cel + area_loss + 0.5 * dist_c + 0.5 * dist_length


if __name__ == "__main__":
    key = jax.random.PRNGKey(0)
    k1, k2 = jax.random.split(key, 2)

    def make_gt(B, H, W, dtype):
        rows = jnp.arange(H)[None, :, None]
        cols = jnp.arange(W)[None, None, :]
        shift = jnp.arange(B)[:, None, None]
        return (((rows >= 3 + shift) & (rows < H - 6 + shift)) &
                ((cols >= 4 + shift) & (cols < W - 4 + shift))).astype(dtype)

    loss_fn = jax.jit(wnet_loss)

    # Case 1: binary (C == 2) fast path, f32 logits, int32 labels, even batch.
    x1 = jax.random.normal(k1, (2, 2, 16, 16), dtype=jnp.float32)
    gt1 = make_gt(2, 16, 16, jnp.int32)
    out1 = jax.block_until_ready(loss_fn(x1, gt1))
    ref1 = wnet_loss_ref(x1, gt1)
    assert jnp.isfinite(out1), f"non-finite loss: {out1}"
    assert jnp.allclose(out1, ref1, rtol=1e-4, atol=1e-4), (out1, ref1)

    # Case 2: general-C path, bf16 logits, int8 labels, odd batch (exercises the
    # 2-group megacore split and the masked / clamped tail tile: H=40, tile=32).
    x2 = jax.random.normal(k2, (1, 3, 40, 16), dtype=jnp.bfloat16)
    gt2 = make_gt(1, 40, 16, jnp.int8)
    out2 = jax.block_until_ready(loss_fn(x2, gt2))
    ref2 = wnet_loss_ref(x2, gt2)
    assert jnp.isfinite(out2), f"non-finite loss: {out2}"
    assert jnp.allclose(out2, ref2, rtol=1e-3, atol=1e-3), (out2, ref2)

    # Case 3: empty ground-truth mask -> bbox distance terms disabled.
    gt3 = jnp.zeros((2, 16, 16), jnp.int32)
    out3 = jax.block_until_ready(loss_fn(x1, gt3))
    ref3 = wnet_loss_ref(x1, gt3)
    assert jnp.isfinite(out3), f"non-finite loss: {out3}"
    assert jnp.allclose(out3, ref3, rtol=1e-4, atol=1e-4), (out3, ref3)

    print("KERNEL_OK")
</pallas_src>

<mosaic_0001>
module attributes {stable_mosaic.version = 11 : i64} {
  func.func @kernel(%arg0: i32, %arg1: i32, %arg2: i32, %arg3: memref<1x2x16x16xf32, #tpu.memory_space<vmem>>, %arg4: memref<1x16x16xi32, #tpu.memory_space<vmem>>, %arg5: memref<1x1x8x128xf32, #tpu.memory_space<vmem>>) attributes {dimension_semantics = [#tpu.dimension_semantics<parallel>, #tpu.dimension_semantics<parallel>, #tpu.dimension_semantics<arbitrary>], iteration_bounds = array<i64: 2, 1, 1>, scalar_prefetch = 0 : i64, scratch_operands = 0 : i64, tpu.core_type = #tpu.core_type<tc>, window_params = [{transform_indices = @transform_0, window_bounds = array<i64: 1, 2, 16, 16>}, {transform_indices = @transform_1, window_bounds = array<i64: 1, 16, 16>}, {transform_indices = @transform_2, window_bounds = array<i64: 1, 1, 8, 128>}]} {
    %c1_i32 = arith.constant 1 : i32
    %0 = arith.muli %arg1, %c1_i32 : i32
    %1 = arith.addi %0, %arg2 : i32
    %c16_i32 = arith.constant 16 : i32
    %2 = arith.muli %1, %c16_i32 : i32
    %3 = tpu.iota {dimensions = array<i32: 0>} : vector<16x1xi32>
    %4 = vector.broadcast %2 : i32 to vector<16x1xi32>
    %5 = arith.addi %3, %4 : vector<16x1xi32>
    %c16_i32_0 = arith.constant 16 : i32
    %6 = vector.broadcast %c16_i32_0 : i32 to vector<16x1xi32>
    %7 = arith.cmpi slt, %5, %6 : vector<16x1xi32>
    %c0 = arith.constant 0 : index
    %c0_1 = arith.constant 0 : index
    %c0_2 = arith.constant 0 : index
    %8 = vector.load %arg4[%c0, %c0_1, %c0_2] : memref<1x16x16xi32, #tpu.memory_space<vmem>>, vector<1x16x16xi32>
    %9 = vector.shape_cast %8 : vector<1x16x16xi32> to vector<16x16xi32>
    %c0_i32 = arith.constant 0 : i32
    %10 = vector.shape_cast %7 : vector<16x1xi1> to vector<16x1xi1>
    %11 = vector.broadcast %10 : vector<16x1xi1> to vector<16x16xi1>
    %12 = vector.broadcast %c0_i32 : i32 to vector<16x16xi32>
    %13 = arith.select %11, %9, %12 : vector<16x16xi1>, vector<16x16xi32>
    %c1_i32_3 = arith.constant 1 : i32
    %14 = vector.broadcast %c1_i32_3 : i32 to vector<16x16xi32>
    %15 = arith.cmpi eq, %13, %14 : vector<16x16xi32>
    %16 = arith.sitofp %13 : vector<16x16xi32> to vector<16x16xf32>
    %c0_4 = arith.constant 0 : index
    %c0_5 = arith.constant 0 : index
    %c0_6 = arith.constant 0 : index
    %c0_7 = arith.constant 0 : index
    %17 = vector.load %arg3[%c0_4, %c0_5, %c0_6, %c0_7] : memref<1x2x16x16xf32, #tpu.memory_space<vmem>>, vector<1x1x16x16xf32>
    %18 = vector.shape_cast %17 : vector<1x1x16x16xf32> to vector<16x16xf32>
    %cst = arith.constant 0.000000e+00 : f32
    %19 = vector.shape_cast %7 : vector<16x1xi1> to vector<16x1xi1>
    %20 = vector.broadcast %19 : vector<16x1xi1> to vector<16x16xi1>
    %21 = vector.broadcast %cst : f32 to vector<16x16xf32>
    %22 = arith.select %20, %18, %21 : vector<16x16xi1>, vector<16x16xf32>
    %c0_8 = arith.constant 0 : index
    %c1 = arith.constant 1 : index
    %c0_9 = arith.constant 0 : index
    %c0_10 = arith.constant 0 : index
    %23 = vector.load %arg3[%c0_8, %c1, %c0_9, %c0_10] : memref<1x2x16x16xf32, #tpu.memory_space<vmem>>, vector<1x1x16x16xf32>
    %24 = vector.shape_cast %23 : vector<1x1x16x16xf32> to vector<16x16xf32>
    %cst_11 = arith.constant 0.000000e+00 : f32
    %25 = vector.shape_cast %7 : vector<16x1xi1> to vector<16x1xi1>
    %26 = vector.broadcast %25 : vector<16x1xi1> to vector<16x16xi1>
    %27 = vector.broadcast %cst_11 : f32 to vector<16x16xf32>
    %28 = arith.select %26, %24, %27 : vector<16x16xi1>, vector<16x16xf32>
    %29 = arith.subf %28, %22 : vector<16x16xf32>
    %cst_12 = arith.constant 0.000000e+00 : f32
    %30 = vector.broadcast %cst_12 : f32 to vector<16x16xf32>
    %31 = arith.cmpf ogt, %29, %30 : vector<16x16xf32>
    %cst_13 = arith.constant 0.000000e+00 : f32
    %32 = vector.broadcast %cst_13 : f32 to vector<16x16xf32>
    %33 = arith.subf %32, %29 : vector<16x16xf32>
    %34 = arith.select %15, %33, %29 : vector<16x16xi1>, vector<16x16xf32>
    %cst_14 = arith.constant 0.000000e+00 : f32
    %35 = vector.broadcast %cst_14 : f32 to vector<16x16xf32>
    %36 = arith.maximumf %34, %35 : vector<16x16xf32>
    %37 = math.absf %34 : vector<16x16xf32>
    %cst_15 = arith.constant 0.000000e+00 : f32
    %38 = vector.broadcast %cst_15 : f32 to vector<16x16xf32>
    %39 = arith.subf %38, %37 : vector<16x16xf32>
    %40 = math.exp %39 : vector<16x16xf32>
    %cst_16 = arith.constant 1.000000e+00 : f32
    %41 = vector.broadcast %cst_16 : f32 to vector<16x16xf32>
    %42 = arith.addf %41, %40 : vector<16x16xf32>
    %43 = math.log %42 : vector<16x16xf32>
    %44 = arith.addf %36, %43 : vector<16x16xf32>
    %cst_17 = arith.constant 0.000000e+00 : f32
    %45 = vector.shape_cast %7 : vector<16x1xi1> to vector<16x1xi1>
    %46 = vector.broadcast %45 : vector<16x1xi1> to vector<16x16xi1>
    %47 = vector.broadcast %cst_17 : f32 to vector<16x16xf32>
    %48 = arith.select %46, %44, %47 : vector<16x16xi1>, vector<16x16xf32>
    %49 = arith.extui %31 : vector<16x16xi1> to vector<16x16xi32>
    %50 = arith.sitofp %49 : vector<16x16xi32> to vector<16x16xf32>
    %51 = vector.shape_cast %48 : vector<16x16xf32> to vector<1x16x16xf32>
    %cst_18 = arith.constant dense<0.000000e+00> : vector<1xf32>
    %52 = vector.multi_reduction <add>, %51, %cst_18 [1, 2] : vector<1x16x16xf32> to vector<1xf32>
    %53 = vector.shape_cast %52 : vector<1xf32> to vector<1x1x1xf32>
    %54 = vector.extract %53[0, 0, 0] : f32 from vector<1x1x1xf32>
    %55 = vector.shape_cast %16 : vector<16x16xf32> to vector<1x16x16xf32>
    %cst_19 = arith.constant dense<0.000000e+00> : vector<1xf32>
    %56 = vector.multi_reduction <add>, %55, %cst_19 [1, 2] : vector<1x16x16xf32> to vector<1xf32>
    %57 = vector.shape_cast %56 : vector<1xf32> to vector<1x1x1xf32>
    %58 = vector.extract %57[0, 0, 0] : f32 from vector<1x1x1xf32>
    %59 = vector.shape_cast %50 : vector<16x16xf32> to vector<1x16x16xf32>
    %cst_20 = arith.constant dense<0.000000e+00> : vector<1xf32>
    %60 = vector.multi_reduction <add>, %59, %cst_20 [1, 2] : vector<1x16x16xf32> to vector<1xf32>
    %61 = vector.shape_cast %60 : vector<1xf32> to vector<1x1x1xf32>
    %62 = vector.extract %61[0, 0, 0] : f32 from vector<1x1x1xf32>
    %63 = arith.extui %15 : vector<16x16xi1> to vector<16x16xi32>
    %64 = arith.sitofp %63 : vector<16x16xi32> to vector<16x16xf32>
    %cst_21 = arith.constant dense<0xFF800000> : vector<16xf32>
    %65 = vector.multi_reduction <maximumf>, %50, %cst_21 [1] : vector<16x16xf32> to vector<16xf32>
    %66 = vector.shape_cast %65 : vector<16xf32> to vector<16x1xf32>
    %cst_22 = arith.constant dense<0xFF800000> : vector<16xf32>
    %67 = vector.multi_reduction <maximumf>, %50, %cst_22 [0] : vector<16x16xf32> to vector<16xf32>
    %68 = vector.shape_cast %67 : vector<16xf32> to vector<1x16xf32>
    %cst_23 = arith.constant dense<0xFF800000> : vector<16xf32>
    %69 = vector.multi_reduction <maximumf>, %64, %cst_23 [1] : vector<16x16xf32> to vector<16xf32>
    %70 = vector.shape_cast %69 : vector<16xf32> to vector<16x1xf32>
    %cst_24 = arith.constant dense<0xFF800000> : vector<16xf32>
    %71 = vector.multi_reduction <maximumf>, %64, %cst_24 [0] : vector<16x16xf32> to vector<16xf32>
    %72 = vector.shape_cast %71 : vector<16xf32> to vector<1x16xf32>
    %73 = arith.sitofp %5 : vector<16x1xi32> to vector<16x1xf32>
    %74 = tpu.iota {dimensions = array<i32: 1>} : vector<1x16xi32>
    %75 = arith.sitofp %74 : vector<1x16xi32> to vector<1x16xf32>
    %cst_25 = arith.constant 0.000000e+00 : f32
    %76 = vector.broadcast %cst_25 : f32 to vector<16x1xf32>
    %77 = arith.cmpf ogt, %66, %76 : vector<16x1xf32>
    %cst_26 = arith.constant 1.000000e+09 : f32
    %78 = vector.broadcast %cst_26 : f32 to vector<16x1xf32>
    %79 = arith.select %77, %73, %78 : vector<16x1xi1>, vector<16x1xf32>
    %80 = vector.shape_cast %79 : vector<16x1xf32> to vector<1x16x1xf32>
    %cst_27 = arith.constant dense<0x7F800000> : vector<1xf32>
    %81 = vector.multi_reduction <minimumf>, %80, %cst_27 [1, 2] : vector<1x16x1xf32> to vector<1xf32>
    %82 = vector.shape_cast %81 : vector<1xf32> to vector<1x1x1xf32>
    %83 = vector.extract %82[0, 0, 0] : f32 from vector<1x1x1xf32>
    %cst_28 = arith.constant 0.000000e+00 : f32
    %84 = vector.broadcast %cst_28 : f32 to vector<16x1xf32>
    %85 = arith.cmpf ogt, %66, %84 : vector<16x1xf32>
    %cst_29 = arith.constant 0.000000e+00 : f32
    %86 = vector.broadcast %cst_29 : f32 to vector<16x1xf32>
    %87 = arith.subf %86, %73 : vector<16x1xf32>
    %cst_30 = arith.constant 1.000000e+09 : f32
    %88 = vector.broadcast %cst_30 : f32 to vector<16x1xf32>
    %89 = arith.select %85, %87, %88 : vector<16x1xi1>, vector<16x1xf32>
    %90 = vector.shape_cast %89 : vector<16x1xf32> to vector<1x16x1xf32>
    %cst_31 = arith.constant dense<0x7F800000> : vector<1xf32>
    %91 = vector.multi_reduction <minimumf>, %90, %cst_31 [1, 2] : vector<1x16x1xf32> to vector<1xf32>
    %92 = vector.shape_cast %91 : vector<1xf32> to vector<1x1x1xf32>
    %93 = vector.extract %92[0, 0, 0] : f32 from vector<1x1x1xf32>
    %cst_32 = arith.constant 0.000000e+00 : f32
    %94 = vector.broadcast %cst_32 : f32 to vector<1x16xf32>
    %95 = arith.cmpf ogt, %68, %94 : vector<1x16xf32>
    %cst_33 = arith.constant 1.000000e+09 : f32
    %96 = vector.broadcast %cst_33 : f32 to vector<1x16xf32>
    %97 = arith.select %95, %75, %96 : vector<1x16xi1>, vector<1x16xf32>
    %98 = vector.shape_cast %97 : vector<1x16xf32> to vector<1x1x16xf32>
    %cst_34 = arith.constant dense<0x7F800000> : vector<1xf32>
    %99 = vector.multi_reduction <minimumf>, %98, %cst_34 [1, 2] : vector<1x1x16xf32> to vector<1xf32>
    %100 = vector.shape_cast %99 : vector<1xf32> to vector<1x1x1xf32>
    %101 = vector.extract %100[0, 0, 0] : f32 from vector<1x1x1xf32>
    %cst_35 = arith.constant 0.000000e+00 : f32
    %102 = vector.broadcast %cst_35 : f32 to vector<1x16xf32>
    %103 = arith.cmpf ogt, %68, %102 : vector<1x16xf32>
    %cst_36 = arith.constant 0.000000e+00 : f32
    %104 = vector.broadcast %cst_36 : f32 to vector<1x16xf32>
    %105 = arith.subf %104, %75 : vector<1x16xf32>
    %cst_37 = arith.constant 1.000000e+09 : f32
    %106 = vector.broadcast %cst_37 : f32 to vector<1x16xf32>
    %107 = arith.select %103, %105, %106 : vector<1x16xi1>, vector<1x16xf32>
    %108 = vector.shape_cast %107 : vector<1x16xf32> to vector<1x1x16xf32>
    %cst_38 = arith.constant dense<0x7F800000> : vector<1xf32>
    %109 = vector.multi_reduction <minimumf>, %108, %cst_38 [1, 2] : vector<1x1x16xf32> to vector<1xf32>
    %110 = vector.shape_cast %109 : vector<1xf32> to vector<1x1x1xf32>
    %111 = vector.extract %110[0, 0, 0] : f32 from vector<1x1x1xf32>
    %cst_39 = arith.constant 0.000000e+00 : f32
    %112 = vector.broadcast %cst_39 : f32 to vector<16x1xf32>
    %113 = arith.cmpf ogt, %70, %112 : vector<16x1xf32>
    %cst_40 = arith.constant 1.000000e+09 : f32
    %114 = vector.broadcast %cst_40 : f32 to vector<16x1xf32>
    %115 = arith.select %113, %73, %114 : vector<16x1xi1>, vector<16x1xf32>
    %116 = vector.shape_cast %115 : vector<16x1xf32> to vector<1x16x1xf32>
    %cst_41 = arith.constant dense<0x7F800000> : vector<1xf32>
    %117 = vector.multi_reduction <minimumf>, %116, %cst_41 [1, 2] : vector<1x16x1xf32> to vector<1xf32>
    %118 = vector.shape_cast %117 : vector<1xf32> to vector<1x1x1xf32>
    %119 = vector.extract %118[0, 0, 0] : f32 from vector<1x1x1xf32>
    %cst_42 = arith.constant 0.000000e+00 : f32
    %120 = vector.broadcast %cst_42 : f32 to vector<16x1xf32>
    %121 = arith.cmpf ogt, %70, %120 : vector<16x1xf32>
    %cst_43 = arith.constant 0.000000e+00 : f32
    %122 = vector.broadcast %cst_43 : f32 to vector<16x1xf32>
    %123 = arith.subf %122, %73 : vector<16x1xf32>
    %cst_44 = arith.constant 1.000000e+09 : f32
    %124 = vector.broadcast %cst_44 : f32 to vector<16x1xf32>
    %125 = arith.select %121, %123, %124 : vector<16x1xi1>, vector<16x1xf32>
    %126 = vector.shape_cast %125 : vector<16x1xf32> to vector<1x16x1xf32>
    %cst_45 = arith.constant dense<0x7F800000> : vector<1xf32>
    %127 = vector.multi_reduction <minimumf>, %126, %cst_45 [1, 2] : vector<1x16x1xf32> to vector<1xf32>
    %128 = vector.shape_cast %127 : vector<1xf32> to vector<1x1x1xf32>
    %129 = vector.extract %128[0, 0, 0] : f32 from vector<1x1x1xf32>
    %cst_46 = arith.constant 0.000000e+00 : f32
    %130 = vector.broadcast %cst_46 : f32 to vector<1x16xf32>
    %131 = arith.cmpf ogt, %72, %130 : vector<1x16xf32>
    %cst_47 = arith.constant 1.000000e+09 : f32
    %132 = vector.broadcast %cst_47 : f32 to vector<1x16xf32>
    %133 = arith.select %131, %75, %132 : vector<1x16xi1>, vector<1x16xf32>
    %134 = vector.shape_cast %133 : vector<1x16xf32> to vector<1x1x16xf32>
    %cst_48 = arith.constant dense<0x7F800000> : vector<1xf32>
    %135 = vector.multi_reduction <minimumf>, %134, %cst_48 [1, 2] : vector<1x1x16xf32> to vector<1xf32>
    %136 = vector.shape_cast %135 : vector<1xf32> to vector<1x1x1xf32>
    %137 = vector.extract %136[0, 0, 0] : f32 from vector<1x1x1xf32>
    %cst_49 = arith.constant 0.000000e+00 : f32
    %138 = vector.broadcast %cst_49 : f32 to vector<1x16xf32>
    %139 = arith.cmpf ogt, %72, %138 : vector<1x16xf32>
    %cst_50 = arith.constant 0.000000e+00 : f32
    %140 = vector.broadcast %cst_50 : f32 to vector<1x16xf32>
    %141 = arith.subf %140, %75 : vector<1x16xf32>
    %cst_51 = arith.constant 1.000000e+09 : f32
    %142 = vector.broadcast %cst_51 : f32 to vector<1x16xf32>
    %143 = arith.select %139, %141, %142 : vector<1x16xi1>, vector<1x16xf32>
    %144 = vector.shape_cast %143 : vector<1x16xf32> to vector<1x1x16xf32>
    %cst_52 = arith.constant dense<0x7F800000> : vector<1xf32>
    %145 = vector.multi_reduction <minimumf>, %144, %cst_52 [1, 2] : vector<1x1x16xf32> to vector<1xf32>
    %146 = vector.shape_cast %145 : vector<1xf32> to vector<1x1x1xf32>
    %147 = vector.extract %146[0, 0, 0] : f32 from vector<1x1x1xf32>
    %148 = tpu.iota {dimensions = array<i32: 3>} : vector<1x1x8x128xi32>
    %c3_i32 = arith.constant 3 : i32
    %149 = vector.broadcast %c3_i32 : i32 to vector<1x1x8x128xi32>
    %150 = arith.cmpi slt, %148, %149 : vector<1x1x8x128xi32>
    %cst_53 = arith.constant 0.000000e+00 : f32
    %cst_54 = arith.constant 1.000000e+09 : f32
    %151 = vector.broadcast %cst_53 : f32 to vector<1x1x8x128xf32>
    %152 = vector.broadcast %cst_54 : f32 to vector<1x1x8x128xf32>
    %153 = arith.select %150, %151, %152 : vector<1x1x8x128xi1>, vector<1x1x8x128xf32>
    %c0_i32_55 = arith.constant 0 : i32
    %154 = arith.cmpi eq, %arg2, %c0_i32_55 : i32
    %155 = arith.extui %154 : i1 to i32
    %c0_i32_56 = arith.constant 0 : i32
    %156 = arith.cmpi ne, %155, %c0_i32_56 : i32
    scf.if %156 {
      %c0_68 = arith.constant 0 : index
      %c0_69 = arith.constant 0 : index
      %c0_70 = arith.constant 0 : index
      %c0_71 = arith.constant 0 : index
      %206 = vector.load %arg5[%c0_68, %c0_69, %c0_70, %c0_71] : memref<1x1x8x128xf32, #tpu.memory_space<vmem>>, vector<1x1x8x128xf32>
      tpu.vector_store %arg5[%c0_68, %c0_69, %c0_70, %c0_71], %153 {strides = array<i32>} : memref<1x1x8x128xf32, #tpu.memory_space<vmem>>, vector<1x1x8x128xf32>,
    } else {
    }
    %c0_i32_57 = arith.constant 0 : i32
    %157 = vector.broadcast %c0_i32_57 : i32 to vector<1x1x8x128xi32>
    %158 = arith.cmpi eq, %148, %157 : vector<1x1x8x128xi32>
    %159 = vector.broadcast %54 : f32 to vector<1x1x8x128xf32>
    %160 = arith.select %158, %159, %153 : vector<1x1x8x128xi1>, vector<1x1x8x128xf32>
    %c1_i32_58 = arith.constant 1 : i32
    %161 = vector.broadcast %c1_i32_58 : i32 to vector<1x1x8x128xi32>
    %162 = arith.cmpi eq, %148, %161 : vector<1x1x8x128xi32>
    %163 = vector.broadcast %58 : f32 to vector<1x1x8x128xf32>
    %164 = arith.select %162, %163, %160 : vector<1x1x8x128xi1>, vector<1x1x8x128xf32>
    %c2_i32 = arith.constant 2 : i32
    %165 = vector.broadcast %c2_i32 : i32 to vector<1x1x8x128xi32>
    %166 = arith.cmpi eq, %148, %165 : vector<1x1x8x128xi32>
    %167 = vector.broadcast %62 : f32 to vector<1x1x8x128xf32>
    %168 = arith.select %166, %167, %164 : vector<1x1x8x128xi1>, vector<1x1x8x128xf32>
    %c3_i32_59 = arith.constant 3 : i32
    %169 = vector.broadcast %c3_i32_59 : i32 to vector<1x1x8x128xi32>
    %170 = arith.cmpi eq, %148, %169 : vector<1x1x8x128xi32>
    %171 = vector.broadcast %83 : f32 to vector<1x1x8x128xf32>
    %172 = arith.select %170, %171, %168 : vector<1x1x8x128xi1>, vector<1x1x8x128xf32>
    %c4_i32 = arith.constant 4 : i32
    %173 = vector.broadcast %c4_i32 : i32 to vector<1x1x8x128xi32>
    %174 = arith.cmpi eq, %148, %173 : vector<1x1x8x128xi32>
    %175 = vector.broadcast %93 : f32 to vector<1x1x8x128xf32>
    %176 = arith.select %174, %175, %172 : vector<1x1x8x128xi1>, vector<1x1x8x128xf32>
    %c5_i32 = arith.constant 5 : i32
    %177 = vector.broadcast %c5_i32 : i32 to vector<1x1x8x128xi32>
    %178 = arith.cmpi eq, %148, %177 : vector<1x1x8x128xi32>
    %179 = vector.broadcast %101 : f32 to vector<1x1x8x128xf32>
    %180 = arith.select %178, %179, %176 : vector<1x1x8x128xi1>, vector<1x1x8x128xf32>
    %c6_i32 = arith.constant 6 : i32
    %181 = vector.broadcast %c6_i32 : i32 to vector<1x1x8x128xi32>
    %182 = arith.cmpi eq, %148, %181 : vector<1x1x8x128xi32>
    %183 = vector.broadcast %111 : f32 to vector<1x1x8x128xf32>
    %184 = arith.select %182, %183, %180 : vector<1x1x8x128xi1>, vector<1x1x8x128xf32>
    %c7_i32 = arith.constant 7 : i32
    %185 = vector.broadcast %c7_i32 : i32 to vector<1x1x8x128xi32>
    %186 = arith.cmpi eq, %148, %185 : vector<1x1x8x128xi32>
    %187 = vector.broadcast %119 : f32 to vector<1x1x8x128xf32>
    %188 = arith.select %186, %187, %184 : vector<1x1x8x128xi1>, vector<1x1x8x128xf32>
    %c8_i32 = arith.constant 8 : i32
    %189 = vector.broadcast %c8_i32 : i32 to vector<1x1x8x128xi32>
    %190 = arith.cmpi eq, %148, %189 : vector<1x1x8x128xi32>
    %191 = vector.broadcast %129 : f32 to vector<1x1x8x128xf32>
    %192 = arith.select %190, %191, %188 : vector<1x1x8x128xi1>, vector<1x1x8x128xf32>
    %c9_i32 = arith.constant 9 : i32
    %193 = vector.broadcast %c9_i32 : i32 to vector<1x1x8x128xi32>
    %194 = arith.cmpi eq, %148, %193 : vector<1x1x8x128xi32>
    %195 = vector.broadcast %137 : f32 to vector<1x1x8x128xf32>
    %196 = arith.select %194, %195, %192 : vector<1x1x8x128xi1>, vector<1x1x8x128xf32>
    %c10_i32 = arith.constant 10 : i32
    %197 = vector.broadcast %c10_i32 : i32 to vector<1x1x8x128xi32>
    %198 = arith.cmpi eq, %148, %197 : vector<1x1x8x128xi32>
    %199 = vector.broadcast %147 : f32 to vector<1x1x8x128xf32>
    %200 = arith.select %198, %199, %196 : vector<1x1x8x128xi1>, vector<1x1x8x128xf32>
    %c0_60 = arith.constant 0 : index
    %c0_61 = arith.constant 0 : index
    %c0_62 = arith.constant 0 : index
    %c0_63 = arith.constant 0 : index
    %201 = vector.load %arg5[%c0_60, %c0_61, %c0_62, %c0_63] : memref<1x1x8x128xf32, #tpu.memory_space<vmem>>, vector<1x1x8x128xf32>
    %202 = arith.addf %201, %200 : vector<1x1x8x128xf32>
    %203 = arith.minimumf %201, %200 : vector<1x1x8x128xf32>
    %204 = arith.select %150, %202, %203 : vector<1x1x8x128xi1>, vector<1x1x8x128xf32>
    %c0_64 = arith.constant 0 : index
    %c0_65 = arith.constant 0 : index
    %c0_66 = arith.constant 0 : index
    %c0_67 = arith.constant 0 : index
    %205 = vector.load %arg5[%c0_64, %c0_65, %c0_66, %c0_67] : memref<1x1x8x128xf32, #tpu.memory_space<vmem>>, vector<1x1x8x128xf32>
    tpu.vector_store %arg5[%c0_64, %c0_65, %c0_66, %c0_67], %204 {strides = array<i32>} : memref<1x1x8x128xf32, #tpu.memory_space<vmem>>, vector<1x1x8x128xf32>,
    return
  }
  func.func @transform_0(%arg0: i32, %arg1: i32, %arg2: i32) -> (i32, i32, i32, i32) {
    %c1_i32 = arith.constant 1 : i32
    %0 = arith.muli %arg1, %c1_i32 : i32
    %1 = arith.addi %0, %arg2 : i32
    %c0_i32 = arith.constant 0 : i32
    %2 = arith.minsi %1, %c0_i32 : i32
    %c0_i32_0 = arith.constant 0 : i32
    %c0_i32_1 = arith.constant 0 : i32
    %c0_i32_2 = arith.constant 0 : i32
    return %arg0, %c0_i32_0, %2, %c0_i32_1 : i32, i32, i32, i32
  }
  func.func @transform_1(%arg0: i32, %arg1: i32, %arg2: i32) -> (i32, i32, i32) {
    %c1_i32 = arith.constant 1 : i32
    %0 = arith.muli %arg1, %c1_i32 : i32
    %1 = arith.addi %0, %arg2 : i32
    %c0_i32 = arith.constant 0 : i32
    %2 = arith.minsi %1, %c0_i32 : i32
    %c0_i32_0 = arith.constant 0 : i32
    %c0_i32_1 = arith.constant 0 : i32
    return %arg0, %2, %c0_i32_0 : i32, i32, i32
  }
  func.func @transform_2(%arg0: i32, %arg1: i32, %arg2: i32) -> (i32, i32, i32, i32) {
    %c0_i32 = arith.constant 0 : i32
    %c0_i32_0 = arith.constant 0 : i32
    %c0_i32_1 = arith.constant 0 : i32
    return %arg0, %arg1, %c0_i32, %c0_i32_0 : i32, i32, i32, i32
  }
}

</mosaic_0001>

<llo_original>
// kernel: wnet_loss.1
$region0: #{wnet_loss.1}
  #allocation0 [shape = 'u32[]', space=smem, size = 0x4, offset = 0x4, fixed_abs, tag = 'smem constant byte address 0x4 - core index']
  #allocation1 [shape = 'u32[144,128]{1,0:T(1,128)}', space=vmem, size = 0x12000, scoped, tag = 'internal scratch']
  %s0 = inlined_call_operand.hbm [shape: f32[2,2,16,16], index: 0, kind: input, shape index: {}]
  %s1 = inlined_call_operand.hbm [shape: s32[2,16,16], index: 1, kind: input, shape index: {}]
  %s2 = inlined_call_operand.vmem [shape: f32[2,1,8,128], index: 2, kind: output, shape index: {}]
  %s3 = sld [smem:[#allocation0]]
  $region53: #{wnet_loss.1} parent=0
    _
  %s5 = ssub.s32 1, %s3
  %s6 = scalar_select 0, %s5, %s3
  $region1: #{wnet_loss.1} parent=0
    #allocation2 [shape = 'u8[32768]{0}', space=vmem, size = 0x8000, scoped, tag = 'input window, operand 0']
    #allocation3 [shape = 's32[2]{0}', space=sflag, size = 0x8, scoped, tag = 'scoped memory for wnet_loss.1']
    #allocation4 [shape = 'u8[16384]{0}', space=vmem, size = 0x4000, scoped, tag = 'input window, operand 1']
    #allocation5 [shape = 's32[2]{0}', space=sflag, size = 0x8, scoped, tag = 'scoped memory for wnet_loss.1']
    %7 = vsyncpa [#allocation3], 0
    %s8 = scalar_lea.sflag [#allocation3], 1
    %9 = vsyncpa %s8, 0
    %10 = vsyncpa [#allocation5], 0
    %s11 = scalar_lea.sflag [#allocation5], 1
    %12 = vsyncpa %s11, 0
    loop: start=0, step=1, limit=4
    $region2: #{wnet_loss.1} parent=1 // loop_pre_header
      _
    $region3: #{wnet_loss.1} parent=1 // loop_header
      %s14 = sphi 0, %s18
      %p15 = scmp.ge.s32.totalorder %s14, 4
      %s21 = sphi 0, %s40
      %s22 = sphi 0, %s36
      %s23 = sphi 0, %s32
      %s24 = sphi 0, %s21
      %s25 = sphi 0, %s22
      %s26 = sphi 0, %s23
      %s27 = sphi 0, %s24
      %s28 = sphi 0, %s25
      %s29 = sphi 0, %s26
      %s51 = sphi 0, %s53
      %s54 = sphi 0, %s51
      %s55 = sphi 0, %s54
      %s71 = sphi 0, %s55
      %s85 = sphi 0, %s87
      %s88 = sphi 0, %s85
      %s89 = sphi 0, %s88
      %s105 = sphi 0, %s89
      %s113 = sphi 0, %s115
      %s116 = sphi 0, %s113
      %s117 = sphi 0, %s116
      %s133 = sphi 0, %s117
    $region4: #{wnet_loss.1} parent=1 // loop_header_branch
      %17 = sbr.rel (%p15) target = $region8
    $region5: #{wnet_loss.1} parent=1 // loop_body
      %s19 = ssub.s32 %s14, 1
      %s20 = ssub.s32 %s14, 2
      %s30 = sadd.s32 1, %s23
      %p31 = scmp.ge.s32.totalorder %s30, 1
      %s32 = scalar_select %p31, 0, %s30
      %s33 = sadd.s32 1, %s22
      %s34 = scalar_select %p31, %s33, %s22
      %p35 = scmp.ge.s32.totalorder %s34, 1
      %s36 = scalar_select %p35, 0, %s34
      %s37 = sadd.s32 1, %s21
      %s38 = scalar_select %p35, %s37, %s21
      %p39 = scmp.ge.s32.totalorder %s38, 2
      %s40 = scalar_select %p39, 0, %s38
      %s41 = sadd.s32 %s22, %s23
      %p42 = scmp.lt.s32.totalorder %s41, 0
      %s43 = scalar_select %p42, %s41, 0
      %s44 = sadd.s32 %s36, %s32
      %p45 = scmp.lt.s32.totalorder %s44, 0
      %s46 = scalar_select %p45, %s44, 0
      %s47 = ssub.s32 %s21, %s40
      %s48 = ssub.s32 %s43, %s46
      %s49 = sor.u32 %s47, %s48
      %p50 = scmp.eq.s32.totalorder %s49, 0
      %s52 = sadd.s32 %s51, 1
      %s53 = scalar_select %p50, %s51, %s52
      %p56 = pneg %p50
      %p57 = scmp.eq.s32.totalorder %s14, 1
      %p58 = por %p56, %p57
      %p59 = scmp.ne.s32.totalorder %s51, %s54
      %p60 = scmp.eq.s32.totalorder %s14, 0
      %p61 = por %p59, %p60
      %p62 = scmp.ne.s32.totalorder %s51, %s54
      %p63 = scmp.eq.s32.totalorder %s19, 1
      %p64 = por %p62, %p63
      %p65 = scmp.ne.s32.totalorder %s54, %s55
      %p66 = scmp.eq.s32.totalorder %s19, 0
      %p67 = por %p65, %p66
      %p68 = scmp.ne.s32.totalorder %s54, %s55
      %p69 = scmp.eq.s32.totalorder %s20, 1
      %p70 = por %p68, %p69
      %p72 = scmp.ne.s32.totalorder %s55, %s71
      %p73 = scmp.eq.s32.totalorder %s20, 0
      %p74 = por %p72, %p73
      %s75 = sadd.s32 %s22, %s23
      %p76 = scmp.lt.s32.totalorder %s75, 0
      %s77 = scalar_select %p76, %s75, 0
      %s78 = sadd.s32 %s36, %s32
      %p79 = scmp.lt.s32.totalorder %s78, 0
      %s80 = scalar_select %p79, %s78, 0
      %s81 = ssub.s32 %s21, %s40
      %s82 = ssub.s32 %s77, %s80
      %s83 = sor.u32 %s81, %s82
      %p84 = scmp.eq.s32.totalorder %s83, 0
      %s86 = sadd.s32 %s85, 1
      %s87 = scalar_select %p84, %s85, %s86
      %p90 = pneg %p84
      %p91 = scmp.eq.s32.totalorder %s14, 1
      %p92 = por %p90, %p91
      %p93 = scmp.ne.s32.totalorder %s85, %s88
      %p94 = scmp.eq.s32.totalorder %s14, 0
      %p95 = por %p93, %p94
      %p96 = scmp.ne.s32.totalorder %s85, %s88
      %p97 = scmp.eq.s32.totalorder %s19, 1
      %p98 = por %p96, %p97
      %p99 = scmp.ne.s32.totalorder %s88, %s89
      %p100 = scmp.eq.s32.totalorder %s19, 0
      %p101 = por %p99, %p100
      %p102 = scmp.ne.s32.totalorder %s88, %s89
      %p103 = scmp.eq.s32.totalorder %s20, 1
      %p104 = por %p102, %p103
      %p106 = scmp.ne.s32.totalorder %s89, %s105
      %p107 = scmp.eq.s32.totalorder %s20, 0
      %p108 = por %p106, %p107
      %s109 = ssub.s32 %s21, %s40
      %s110 = ssub.s32 %s22, %s36
      %s111 = sor.u32 %s109, %s110
      %p112 = scmp.eq.s32.totalorder %s111, 0
      %s114 = sadd.s32 %s113, 1
      %s115 = scalar_select %p112, %s113, %s114
      %p118 = pneg %p112
      %p119 = scmp.eq.s32.totalorder %s14, 1
      %p120 = por %p118, %p119
      %p121 = scmp.ne.s32.totalorder %s113, %s116
      %p122 = scmp.eq.s32.totalorder %s14, 0
      %p123 = por %p121, %p122
      %p124 = scmp.ne.s32.totalorder %s113, %s116
      %p125 = scmp.eq.s32.totalorder %s19, 1
      %p126 = por %p124, %p125
      %p127 = scmp.ne.s32.totalorder %s116, %s117
      %p128 = scmp.eq.s32.totalorder %s19, 0
      %p129 = por %p127, %p128
      %p130 = scmp.ne.s32.totalorder %s116, %s117
      %p131 = scmp.eq.s32.totalorder %s20, 1
      %p132 = por %p130, %p131
      %p134 = scmp.ne.s32.totalorder %s117, %s133
      %p135 = scmp.eq.s32.totalorder %s20, 0
      %p136 = por %p134, %p135
      %p137 = scmp.le.s32.totalorder 1, %s14
      %p138 = scmp.lt.s32.totalorder %s14, 3
      %p139 = pnand %p137, %p138
      %p140 = pneg %p139
      // Predicated region
      $region9: #{wnet_loss.1} parent=5 // pred_check
        _
      $region10: #{wnet_loss.1} parent=5 // pred_check_branch
        %142 = sbr.rel (%p139) target = $region12
      $region11: #{wnet_loss.1} parent=5 // pred_region
        %s143 = ssub.s32 %s14, 1
      $region12: #{wnet_loss.1} parent=5 // pred_fallthru
        _
      %p144 = scmp.lt.s32.totalorder %s14, 2
      // Predicated region
      $region13: #{wnet_loss.1} parent=5 // pred_check
        %p145 = pneg %p144
      $region14: #{wnet_loss.1} parent=5 // pred_check_branch
        %147 = sbr.rel (%p145) target = $region16
      $region15: #{wnet_loss.1} parent=5 // pred_region
        // Predicated region
        $region17: #{wnet_loss.1} parent=15 // pred_check
          %p148 = pneg %p61
        $region18: #{wnet_loss.1} parent=15 // pred_check_branch
          %150 = sbr.rel (%p148) target = $region20
        $region19: #{wnet_loss.1} parent=15 // pred_region
          %s151 = sand.u32 %s51, 1
          %s152 = scalar_lea.sflag [#allocation3], %s151
          %s153 = sand.u32 %s51, 1
          %s154 = smul.addr %s153, 32
          %s155 = scalar_lea.vmem [#allocation2], %s154
          %s156 = sadd.s32 %s22, %s23
          %p157 = scmp.lt.s32.totalorder %s156, 0
          %s158 = scalar_select %p157, %s156, 0
          %s159 = smul.u32 2, %s158
          %s161 = ssub.s32 512, 512
          %162 = vsyncadd %s152, %s161
          %s163 = smul.addr %s21, 4
          %s164 = sadd.s32 %s159, %s163
          %s165 = smul.addr %s164, 128
          %s166 = scalar_lea.hbm %s0, %s165
          %s167 = sshll.u32 %s155, 4
          %s168 = int_to_ptr.vmem [resolvable:$true] %s167
          %173 = dma.hbm_to_vmem [thread:$0]  %s166, 512, %s168, %s152, 128, 128, 8
        $region20: #{wnet_loss.1} parent=15 // pred_fallthru
          _
        // Predicated region
        $region21: #{wnet_loss.1} parent=15 // pred_check
          %p174 = pneg %p95
        $region22: #{wnet_loss.1} parent=15 // pred_check_branch
          %176 = sbr.rel (%p174) target = $region24
        $region23: #{wnet_loss.1} parent=15 // pred_region
          %s177 = sand.u32 %s85, 1
          %s178 = scalar_lea.sflag [#allocation5], %s177
          %s179 = sand.u32 %s85, 1
          %s180 = smul.addr %s179, 16
          %s181 = scalar_lea.vmem [#allocation4], %s180
          %s182 = sadd.s32 %s22, %s23
          %p183 = scmp.lt.s32.totalorder %s182, 0
          %s184 = scalar_select %p183, %s182, 0
          %s185 = smul.u32 2, %s184
          %s187 = ssub.s32 256, 256
          %188 = vsyncadd %s178, %s187
          %s189 = smul.addr %s21, 2
          %s190 = sadd.s32 %s185, %s189
          %s191 = smul.addr %s190, 128
          %s192 = scalar_lea.hbm %s1, %s191
          %s193 = sshll.u32 %s181, 4
          %s194 = int_to_ptr.vmem [resolvable:$true] %s193
          %199 = dma.hbm_to_vmem [thread:$0]  %s192, 256, %s194, %s178, 128, 128, 8
        $region24: #{wnet_loss.1} parent=15 // pred_fallthru
          _
      $region16: #{wnet_loss.1} parent=5 // pred_fallthru
        _
      %p200 = scmp.le.s32.totalorder 1, %s14
      %p201 = scmp.lt.s32.totalorder %s14, 3
      %p202 = pnand %p200, %p201
      %p203 = pneg %p202
      // Predicated region
      $region25: #{wnet_loss.1} parent=5 // pred_check
        _
      $region26: #{wnet_loss.1} parent=5 // pred_check_branch
        %205 = sbr.rel (%p202) target = $region28
      $region27: #{wnet_loss.1} parent=5 // pred_region
        %s206 = ssub.s32 %s14, 1
        %s207 = sand.u32 %s54, 1
        %s208 = scalar_lea.sflag [#allocation3], %s207
        %s209 = sand.u32 %s54, 1
        %s210 = smul.addr %s209, 32
        %s211 = scalar_lea.vmem [#allocation2], %s210
        // Predicated region
        $region29: #{wnet_loss.1} parent=27 // pred_check
          %p212 = pneg %p67
        $region30: #{wnet_loss.1} parent=27 // pred_check_branch
          %214 = sbr.rel (%p212) target = $region32
        $region31: #{wnet_loss.1} parent=27 // pred_region
          %215 = dma.done %s208, 512
        $region32: #{wnet_loss.1} parent=27 // pred_fallthru
          _
        %s216 = sand.u32 %s88, 1
        %s217 = scalar_lea.sflag [#allocation5], %s216
        %s218 = sand.u32 %s88, 1
        %s219 = smul.addr %s218, 16
        %s220 = scalar_lea.vmem [#allocation4], %s219
        // Predicated region
        $region33: #{wnet_loss.1} parent=27 // pred_check
          %p221 = pneg %p101
        $region34: #{wnet_loss.1} parent=27 // pred_check_branch
          %223 = sbr.rel (%p221) target = $region36
        $region35: #{wnet_loss.1} parent=27 // pred_region
          %224 = dma.done %s217, 256
        $region36: #{wnet_loss.1} parent=27 // pred_fallthru
          _
        %s225 = sand.u32 %s54, 1
        %s226 = scalar_lea.sflag [#allocation3], %s225
        %s227 = sand.u32 %s54, 1
        %s228 = smul.addr %s227, 32
        %s229 = scalar_lea.vmem [#allocation2], %s228
        %p230 = pneg %p67
        %p231 = pneg %p64
        %s232 = sand.u32 %s88, 1
        %s233 = scalar_lea.sflag [#allocation5], %s232
        %s234 = sand.u32 %s88, 1
        %s235 = smul.addr %s234, 16
        %s236 = scalar_lea.vmem [#allocation4], %s235
        %p237 = pneg %p101
        %p238 = pneg %p98
        %p239 = pneg %p129
        %p240 = pneg %p126
        %p241 = scmp.lt.s32.totalorder %s24, 1
        %s242 = scalar_select %p241, %s24, 1
        %p243 = scmp.lt.s32.totalorder %s25, 0
        %s244 = scalar_select %p243, %s25, 0
        %s245 = sadd.s32 %s244, %s242
        %s246 = smul.addr %s245, 8
        %s247 = scalar_lea.vmem %s2, %s246
        %s248 = sadd.s32 %s25, %s26
        %p249 = scmp.lt.s32.totalorder %s248, 0
        %s250 = scalar_select %p249, %s248, 0
        %s251 = smul.u32 2, %s250
        %s252 = sadd.s32 %s25, %s26
        %p253 = scmp.lt.s32.totalorder %s252, 0
        %s254 = scalar_select %p253, %s252, 0
        %s255 = smul.u32 2, %s254
        %p256 = scmp.lt.s32.totalorder %s24, 1
        %s257 = scalar_select %p256, %s24, 1
        %p258 = scmp.lt.s32.totalorder %s25, 0
        %s259 = scalar_select %p258, %s25, 0
        %s260 = sadd.s32 %s259, %s257
        %s261 = smul.addr %s260, 8
        %s262 = scalar_lea.vmem %s2, %s261
        %s263 = sadd.s32 %s25, %s26
        %s264 = smul.u32 %s263, 16
        %v265 = vlaneseq
        %v266 = vshrl.u32 %v265, 7
        %v267 = vadd.s32 %v266, 8
        %v268 = vstv %s264
        %v269 = vadd.s32 %v266, %v268
        %v270 = vadd.s32 %v267, %v268
        %vm271 = vcmp.lt.s32.totalorder %v269, 16
        %vm272 = vcmp.lt.s32.totalorder %v270, 16
        %v273 = vld [vmem:[%s220] sm:$0xff]
        %v274 = vld [vmem:[%s220 + $0x8] sm:$0xff]
        %v275 = vsel %vm271, 1, 0
        %v276 = vsel %vm272, 1, 0
        %vm277 = vcmp.eq.s32.totalorder %v275, 1
        %vm278 = vcmp.eq.s32.totalorder %v276, 1
        %v279 = vsel %vm277, %v273, 0
        %v280 = vsel %vm278, %v274, 0
        %vm281 = vcmp.eq.s32.totalorder %v279, 1
        %vm282 = vcmp.eq.s32.totalorder %v280, 1
        %v283 = vcvt.s32.f32 %v279
        %v284 = vcvt.s32.f32 %v280
        %v285 = vld [vmem:[%s211] sm:$0xff]
        %v286 = vld [vmem:[%s211 + $0x8] sm:$0xff]
        %v287 = vsel %vm277, %v285, 0.0
        %v288 = vsel %vm278, %v286, 0.0
        %s289 = scalar_lea.vmem %s211, 16 [#allocation2]
        %v290 = vld [vmem:[%s289] sm:$0xff]
        %v291 = vld [vmem:[%s289 + $0x8] sm:$0xff]
        %v292 = vsel %vm277, %v290, 0.0
        %v293 = vsel %vm278, %v291, 0.0
        %v294 = vsub.f32 %v292, %v287
        %v295 = vsub.f32 %v293, %v288
        %vm296 = vcmp.gt.f32.partialorder %v294, 0.0
        %vm297 = vcmp.gt.f32.partialorder %v295, 0.0
        %v298 = vsub.f32 0.0, %v294
        %v299 = vsub.f32 0.0, %v295
        %v300 = vsel %vm281, %v298, %v294
        %v301 = vsel %vm282, %v299, %v295
        %v302 = vmax.f32 %v300, 0.0
        %v303 = vmax.f32 %v301, 0.0
        %v304 = vand.u32 2147483647, %v300
        %v305 = vand.u32 2147483647, %v301
        %v306 = vsub.f32 0.0, %v304
        %v307 = vsub.f32 0.0, %v305
        %v308 = vmul.f32 %v306, 1.442695
        %v309 = vpow.pop %v308
        %v310 = vmul.f32 %v307, 1.442695
        %v311 = vpow.pop %v310
        %v312 = vadd.f32 %v309, 1.0
        %v313 = vadd.f32 %v311, 1.0
        %v314 = vlog2.pop %v312
        %v315 = vmul.f32 %v314, 0.6931472
        %v316 = vlog2.pop %v313
        %v317 = vmul.f32 %v316, 0.6931472
        %v318 = vadd.f32 %v302, %v315
        %v319 = vadd.f32 %v303, %v317
        %v320 = vsel %vm277, %v318, 0.0
        %v321 = vsel %vm278, %v319, 0.0
        %v322 = vsel %vm296, 1, 0
        %v323 = vsel %vm297, 1, 0
        %v324 = vcvt.s32.f32 %v322
        %v325 = vcvt.s32.f32 %v323
        %vm326 = vcmask 130048
        %v327 = vsel %vm326, %v320, 0.0
        %v328 = vsel %vm326, %v321, 0.0
        %v329 = vadd.f32 %v327, %v328
        %330 = vadd.xlane.f32.xlu0 %v329
        %v331 = vpop.xlane.xlu0 %330
        %v332 = vrot.slane %v331, 4
        %v333 = vadd.f32 %v331, %v332
        %v334 = vrot.slane %v333, 2
        %v335 = vadd.f32 %v333, %v334
        %v336 = vrot.slane %v335, 1
        %v337 = vadd.f32 %v335, %v336
        %s338 = vtos %v337
        %v339 = vsel %vm326, %v283, 0.0
        %v340 = vsel %vm326, %v284, 0.0
        %v341 = vadd.f32 %v339, %v340
        %342 = vadd.xlane.f32.xlu0 %v341
        %v343 = vpop.xlane.xlu0 %342
        %v344 = vrot.slane %v343, 4
        %v345 = vadd.f32 %v343, %v344
        %v346 = vrot.slane %v345, 2
        %v347 = vadd.f32 %v345, %v346
        %v348 = vrot.slane %v347, 1
        %v349 = vadd.f32 %v347, %v348
        %s350 = vtos %v349
        %v351 = vsel %vm326, %v324, 0.0
        %v352 = vsel %vm326, %v325, 0.0
        %v353 = vadd.f32 %v351, %v352
        %354 = vadd.xlane.f32.xlu0 %v353
        %v355 = vpop.xlane.xlu0 %354
        %v356 = vrot.slane %v355, 4
        %v357 = vadd.f32 %v355, %v356
        %v358 = vrot.slane %v357, 2
        %v359 = vadd.f32 %v357, %v358
        %v360 = vrot.slane %v359, 1
        %v361 = vadd.f32 %v359, %v360
        %s362 = vtos %v361
        %v363 = vsel %vm281, 1, 0
        %v364 = vsel %vm282, 1, 0
        %v365 = vcvt.s32.f32 %v363
        %v366 = vcvt.s32.f32 %v364
        %v367 = vsel %vm326, %v324, -inf
        %368 = vmax.xlane.f32.xlu0 %v367
        %v369 = vpop.xlane.xlu0 %368
        %v370 = vsel %vm326, %v325, -inf
        %371 = vmax.xlane.f32.xlu0 %v370
        %v372 = vpop.xlane.xlu0 %371
        %v373 = vmax.f32 %v367, %v370
        %v374 = vrot.slane %v373, 4
        %v375 = vmax.f32 %v373, %v374
        %v376 = vrot.slane %v375, 2
        %v377 = vmax.f32 %v375, %v376
        %v378 = vrot.slane %v377, 1
        %v379 = vmax.f32 %v377, %v378
        %v380 = vsel %vm326, %v365, -inf
        %381 = vmax.xlane.f32.xlu0 %v380
        %v382 = vpop.xlane.xlu0 %381
        %v383 = vsel %vm326, %v366, -inf
        %384 = vmax.xlane.f32.xlu0 %v383
        %v385 = vpop.xlane.xlu0 %384
        %v386 = vmax.f32 %v380, %v383
        %v387 = vrot.slane %v386, 4
        %v388 = vmax.f32 %v386, %v387
        %v389 = vrot.slane %v388, 2
        %v390 = vmax.f32 %v388, %v389
        %v391 = vrot.slane %v390, 1
        %v392 = vmax.f32 %v390, %v391
        %v393 = vcvt.s32.f32 %v269
        %v394 = vcvt.s32.f32 %v270
        %v395 = vlaneseq
        %v396 = vand.u32 %v395, 127
        %v397 = vcvt.s32.f32 %v396
        %vm398 = vcmp.gt.f32.partialorder %v369, 0.0
        %vm399 = vcmp.gt.f32.partialorder %v372, 0.0
        %v400 = vsel %vm398, %v393, 1e+09
        %v401 = vsel %vm399, %v394, 1e+09
        %v402 = vmin.f32 %v400, %v401
        %v403 = vrot.slane %v402, 4
        %v404 = vmin.f32 %v402, %v403
        %v405 = vrot.slane %v404, 2
        %v406 = vmin.f32 %v404, %v405
        %v407 = vrot.slane %v406, 1
        %v408 = vmin.f32 %v406, %v407
        %s409 = vtos %v408
        %v410 = vsub.f32 0.0, %v393
        %v411 = vsub.f32 0.0, %v394
        %v412 = vsel %vm398, %v410, 1e+09
        %v413 = vsel %vm399, %v411, 1e+09
        %v414 = vmin.f32 %v412, %v413
        %v415 = vrot.slane %v414, 4
        %v416 = vmin.f32 %v414, %v415
        %v417 = vrot.slane %v416, 2
        %v418 = vmin.f32 %v416, %v417
        %v419 = vrot.slane %v418, 1
        %v420 = vmin.f32 %v418, %v419
        %s421 = vtos %v420
        %vm422 = vcmp.gt.f32.partialorder %v379, 0.0
        %v423 = vsel %vm422, %v397, 1e+09
        %v424 = vsel %vm326, %v423, inf
        %425 = vmin.xlane.f32.xlu0 %v424
        %v426 = vpop.xlane.xlu0 %425
        %s427 = vtos %v426
        %v428 = vsub.f32 0.0, %v397
        %v429 = vsel %vm422, %v428, 1e+09
        %v430 = vsel %vm326, %v429, inf
        %431 = vmin.xlane.f32.xlu0 %v430
        %v432 = vpop.xlane.xlu0 %431
        %s433 = vtos %v432
        %vm434 = vcmp.gt.f32.partialorder %v382, 0.0
        %vm435 = vcmp.gt.f32.partialorder %v385, 0.0
        %v436 = vsel %vm434, %v393, 1e+09
        %v437 = vsel %vm435, %v394, 1e+09
        %v438 = vmin.f32 %v436, %v437
        %v439 = vrot.slane %v438, 4
        %v440 = vmin.f32 %v438, %v439
        %v441 = vrot.slane %v440, 2
        %v442 = vmin.f32 %v440, %v441
        %v443 = vrot.slane %v442, 1
        %v444 = vmin.f32 %v442, %v443
        %s445 = vtos %v444
        %v446 = vsel %vm434, %v410, 1e+09
        %v447 = vsel %vm435, %v411, 1e+09
        %v448 = vmin.f32 %v446, %v447
        %v449 = vrot.slane %v448, 4
        %v450 = vmin.f32 %v448, %v449
        %v451 = vrot.slane %v450, 2
        %v452 = vmin.f32 %v450, %v451
        %v453 = vrot.slane %v452, 1
        %v454 = vmin.f32 %v452, %v453
        %s455 = vtos %v454
        %vm456 = vcmp.gt.f32.partialorder %v392, 0.0
        %v457 = vsel %vm456, %v397, 1e+09
        %v458 = vsel %vm326, %v457, inf
        %459 = vmin.xlane.f32.xlu0 %v458
        %v460 = vpop.xlane.xlu0 %459
        %s461 = vtos %v460
        %v462 = vsel %vm456, %v428, 1e+09
        %v463 = vsel %vm326, %v462, inf
        %464 = vmin.xlane.f32.xlu0 %v463
        %v465 = vpop.xlane.xlu0 %464
        %s466 = vtos %v465
        %vm467 = vcmp.lt.s32.totalorder %v396, 3
        %v468 = vsel %vm467, 0.0, 1e+09
        %p469 = scmp.eq.s32.totalorder %s26, 0
        // Predicated region
        $region37: #{wnet_loss.1} parent=27 // pred_check
          %p470 = pneg %p469
        $region38: #{wnet_loss.1} parent=27 // pred_check_branch
          %472 = sbr.rel (%p470) target = $region40
        $region39: #{wnet_loss.1} parent=27 // pred_region
          %473 = vst [vmem:[%s262] sm:$0xff] %v468
        $region40: #{wnet_loss.1} parent=27 // pred_fallthru
          _
        %vm474 = vcmp.eq.s32.totalorder %v396, 0
        %v475 = vstv %s338
        %v476 = vsel %vm474, %v475, %v468
        %vm477 = vcmp.eq.s32.totalorder %v396, 1
        %v478 = vstv %s350
        %v479 = vsel %vm477, %v478, %v476
        %vm480 = vcmp.eq.s32.totalorder %v396, 2
        %v481 = vstv %s362
        %v482 = vsel %vm480, %v481, %v479
        %vm483 = vcmp.eq.s32.totalorder %v396, 3
        %v484 = vstv %s409
        %v485 = vsel %vm483, %v484, %v482
        %vm486 = vcmp.eq.s32.totalorder %v396, 4
        %v487 = vstv %s421
        %v488 = vsel %vm486, %v487, %v485
        %vm489 = vcmp.eq.s32.totalorder %v396, 5
        %v490 = vstv %s427
        %v491 = vsel %vm489, %v490, %v488
        %vm492 = vcmp.eq.s32.totalorder %v396, 6
        %v493 = vstv %s433
        %v494 = vsel %vm492, %v493, %v491
        %vm495 = vcmp.eq.s32.totalorder %v396, 7
        %v496 = vstv %s445
        %v497 = vsel %vm495, %v496, %v494
        %vm498 = vcmp.eq.s32.totalorder %v396, 8
        %v499 = vstv %s455
        %v500 = vsel %vm498, %v499, %v497
        %vm501 = vcmp.eq.s32.totalorder %v396, 9
        %v502 = vstv %s461
        %v503 = vsel %vm501, %v502, %v500
        %vm504 = vcmp.eq.s32.totalorder %v396, 10
        %v505 = vstv %s466
        %v506 = vsel %vm504, %v505, %v503
        %v507 = vld [vmem:[%s262] sm:$0xff]
        %v508 = vadd.f32 %v507, %v506
        %v509 = vmin.f32 %v507, %v506
        %v510 = vsel %vm467, %v508, %v509
        %511 = vst [vmem:[%s262] sm:$0xff] %v510
        %p512 = scmp.lt.s32.totalorder %s24, 1
        %s513 = scalar_select %p512, %s24, 1
        %p514 = scmp.lt.s32.totalorder %s25, 0
        %s515 = scalar_select %p514, %s25, 0
        %s516 = sadd.s32 %s515, %s513
        %s517 = smul.addr %s516, 8
        %s518 = scalar_lea.vmem %s2, %s517
        // Predicated region
        $region41: #{wnet_loss.1} parent=27 // pred_check
          %p519 = pneg %p126
        $region42: #{wnet_loss.1} parent=27 // pred_check_branch
          %521 = sbr.rel (%p519) target = $region44
        $region43: #{wnet_loss.1} parent=27 // pred_region
          _
        $region44: #{wnet_loss.1} parent=27 // pred_fallthru
          _
      $region28: #{wnet_loss.1} parent=5 // pred_fallthru
        _
      %p522 = scmp.le.s32.totalorder 2, %s14
      // Predicated region
      $region45: #{wnet_loss.1} parent=5 // pred_check
        %p523 = pneg %p522
      $region46: #{wnet_loss.1} parent=5 // pred_check_branch
        %525 = sbr.rel (%p523) target = $region48
      $region47: #{wnet_loss.1} parent=5 // pred_region
        %s526 = ssub.s32 %s14, 2
        // Predicated region
        $region49: #{wnet_loss.1} parent=47 // pred_check
          %p527 = pneg %p132
        $region50: #{wnet_loss.1} parent=47 // pred_check_branch
          %529 = sbr.rel (%p527) target = $region52
        $region51: #{wnet_loss.1} parent=47 // pred_region
          %p530 = scmp.lt.s32.totalorder %s27, 1
          %s531 = scalar_select %p530, %s27, 1
          %p532 = scmp.lt.s32.totalorder %s28, 0
          %s533 = scalar_select %p532, %s28, 0
          %s534 = sadd.s32 %s533, %s531
          %s535 = smul.addr %s534, 8
          %s536 = scalar_lea.vmem %s2, %s535
        $region52: #{wnet_loss.1} parent=47 // pred_fallthru
          _
      $region48: #{wnet_loss.1} parent=5 // pred_fallthru
        _
    $region6: #{wnet_loss.1} parent=1 // loop_footer
      %s18 = sadd.s32 1, %s14
    $region7: #{wnet_loss.1} parent=1 // loop_footer_branch
      %13 = sbr.rel target = $region3
    $region8: #{wnet_loss.1} parent=1 // loop_exit
      _
    %537 = vsyncpa [#allocation3], 1
    %s538 = scalar_lea.sflag [#allocation3], 1
    %539 = vsyncpa %s538, 1
    %540 = vsyncpa [#allocation5], 1
    %s541 = scalar_lea.sflag [#allocation5], 1
    %542 = vsyncpa %s541, 1

</llo_original>
